<compile_context>
chip_gen: v6e
topology: v6e:2x2x1
jax: 0.10.0
libtpu: 0.0.40
codegen_flags: <defaults>
</compile_context>

<pallas_src>
import functools
import math

import jax
import jax.numpy as jnp
import numpy as np
from jax.experimental import pallas as pl
from jax.experimental.pallas import tpu as pltpu

_LOG_2PI = math.log(2.0 * math.pi)
_LANES = 128
_SUBLANES = 8


def _round_up(x, m):
    return ((x + m - 1) // m) * m


def _pad2(a, rows, cols, value=0.0):
    a = jnp.asarray(a, jnp.float32)
    return jnp.pad(a, ((0, rows - a.shape[0]), (0, cols - a.shape[1])),
                   constant_values=value)


def _vmem_cap_bytes():
    """Physical VMEM per TensorCore; conservative 64 MiB fallback (v7x)."""
    try:
        get_info = getattr(pltpu, "get_tpu_info", None)
        if get_info is not None:
            cap = getattr(get_info(), "vmem_capacity_bytes", None)
            if cap:
                return int(cap)
    except Exception:
        pass
    return 64 << 20


def _vmem_limit_bytes(bm, tk, tn, *, x_bytes, w_bytes, n_w_streams):
    x_t = bm * tk * x_bytes
    w_t = n_w_streams * tk * tn * w_bytes
    b_t = 3 * tn * w_bytes
    out_t = bm * tn * 4
    part_t = 2 * tn * 4
    need = 2 * (x_t + w_t + b_t + out_t + part_t)      # double-buffered
    cap = _vmem_cap_bytes()
    return int(min(max(need + (4 << 20), 16 << 20), int(0.85 * cap)))


def _stable_softplus(v):
    # max(v, 0) + log1p(exp(-|v|)) -- no overflow for large positive rho.
    return jnp.maximum(v, 0.0) + jnp.log1p(jnp.exp(-jnp.abs(v)))


def _bayes_sample_kernel(x_ref, w_mu_ref, w_rho_ref, eps_w_ref,
                         b_mu_ref, b_rho_ref, eps_b_ref,
                         out_ref, qpart_ref, ppart_ref,
                         *, sigma_prior, mxu_dtype):
    m = pl.program_id(1)          # batch block
    k = pl.program_id(2)          # K (input-feature) reduction block
    nk = pl.num_programs(2)
    neg_half_inv_var = -0.5 / (sigma_prior * sigma_prior)

    @pl.when(k == 0)
    def _init_out():
        out_ref[...] = jnp.zeros_like(out_ref)

    w_mu = w_mu_ref[...].astype(jnp.float32)
    w_rho = w_rho_ref[...].astype(jnp.float32)
    eps_w = eps_w_ref[...].astype(jnp.float32)
    s_w = _stable_softplus(w_rho) * eps_w          # softplus(rho) * eps
    w = w_mu + s_w

    # Hot path: MXU matmul, accumulated directly into the resident out block.
    out_ref[...] += jnp.dot(x_ref[...].astype(mxu_dtype), w.astype(mxu_dtype),
                            preferred_element_type=jnp.float32)

    # Weight log-probs: once per weight tile (gated on the first batch block).
    # Only a sublane (axis-0) reduce here; lanes are collapsed on the host.
    @pl.when(m == 0)
    def _weight_logprob():
        @pl.when(k == 0)
        def _init_parts():
            qpart_ref[...] = jnp.zeros_like(qpart_ref)
            ppart_ref[...] = jnp.zeros_like(ppart_ref)

        inv_rho = 1.0 / w_rho
        # Posterior (sigma = rho, exactly as the reference): variable part.
        q_elem = -jnp.log(w_rho) - 0.5 * jnp.square(s_w * inv_rho)
        # Prior (closed form): variable part is -0.5 * w^2 / sigma_prior^2.
        p_elem = neg_half_inv_var * (w * w)
        qpart_ref[...] += jnp.sum(q_elem, axis=0, keepdims=True)
        ppart_ref[...] += jnp.sum(p_elem, axis=0, keepdims=True)

    @pl.when(k == nk - 1)
    def _finalize():
        b_mu = b_mu_ref[...].astype(jnp.float32)
        b_rho = b_rho_ref[...].astype(jnp.float32)
        eps_b = eps_b_ref[...].astype(jnp.float32)
        s_b = _stable_softplus(b_rho) * eps_b
        b = b_mu + s_b
        out_ref[...] += b                           # broadcast over rows

        @pl.when(m == 0)
        def _bias_logprob():
            qpart_ref[...] += -jnp.log(b_rho) - 0.5 * jnp.square(s_b / b_rho)
            ppart_ref[...] += neg_half_inv_var * (b * b)


def _bayes_det_kernel(x_ref, w_mu_ref, b_mu_ref, out_ref, *, mxu_dtype):
    k = pl.program_id(2)

    @pl.when(k == 0)
    def _init():
        out_ref[...] = jnp.zeros_like(out_ref)

    out_ref[...] += jnp.dot(x_ref[...].astype(mxu_dtype),
                            w_mu_ref[...].astype(mxu_dtype),
                            preferred_element_type=jnp.float32)

    @pl.when(k == pl.num_programs(2) - 1)
    def _fin():
        out_ref[...] += b_mu_ref[...].astype(jnp.float32)


def bayesian_layer_forward(x, w_mu, w_rho, b_mu, b_rho, sigma_prior, *,
                           eps_w=None, eps_b=None, seed=0, sample=True,
                           mxu_dtype=jnp.bfloat16, param_dtype=jnp.float32,
                           block_m=512, block_k=512, block_n=512):
    """Bayesian linear layer forward.

    x: (B, n_input) f32;  w_*: (n_input, n_output);  b_*: (n_output,)
    eps_w / eps_b: optional pre-drawn N(0, sigma_prior) noise.  If omitted,
    noise is drawn on the host with jax.random.PRNGKey(seed).
    Returns (out (B, n_output) f32, log_q scalar, log_p scalar).
    """
    B, n_in = x.shape
    n_out = w_mu.shape[1]
    sigma_prior = float(sigma_prior)

    # ---- padding / tiling (lane-dense multiples of 128; rows of 8) --------
    b_pad = _round_up(B, _SUBLANES)
    k_pad = _round_up(n_in, _LANES)
    n_pad = _round_up(n_out, _LANES)
    bm = _round_up(min(int(block_m), b_pad), _SUBLANES)
    tk = _round_up(min(int(block_k), k_pad), _LANES)
    tn = _round_up(min(int(block_n), n_pad), _LANES)
    # v7x megacore: give the parallel (N) axis >= 2 blocks when it is free.
    if n_pad // tn < 2 and n_pad >= 2 * _LANES and (n_pad // 2) % _LANES == 0:
        tn = n_pad // 2
    b_pad = _round_up(b_pad, bm)
    k_pad = _round_up(k_pad, tk)
    n_pad = _round_up(n_pad, tn)
    nm, nk, nj = b_pad // bm, k_pad // tk, n_pad // tn

    x_p = _pad2(x, b_pad, k_pad).astype(mxu_dtype)
    w_mu_p = _pad2(w_mu, k_pad, n_pad).astype(param_dtype)
    b_mu_p = _pad2(jnp.reshape(b_mu, (1, n_out)), 1, n_pad).astype(param_dtype)

    x_spec = pl.BlockSpec((bm, tk), lambda j, m, k: (m, k))
    w_spec = pl.BlockSpec((tk, tn), lambda j, m, k: (k, j))
    b_spec = pl.BlockSpec((1, tn), lambda j, m, k: (0, j))
    out_spec = pl.BlockSpec((bm, tn), lambda j, m, k: (m, j))
    part_spec = pl.BlockSpec((1, tn), lambda j, m, k: (0, j))

    n_w_streams = 3 if sample else 1
    cp = pltpu.CompilerParams(
        dimension_semantics=("parallel", "arbitrary", "arbitrary"),
        vmem_limit_bytes=_vmem_limit_bytes(
            bm, tk, tn,
            x_bytes=jnp.dtype(mxu_dtype).itemsize,
            w_bytes=jnp.dtype(param_dtype).itemsize,
            n_w_streams=n_w_streams))

    if not sample:
        out = pl.pallas_call(
            functools.partial(_bayes_det_kernel, mxu_dtype=mxu_dtype),
            out_shape=jax.ShapeDtypeStruct((b_pad, n_pad), jnp.float32),
            grid=(nj, nm, nk),
            in_specs=[x_spec, w_spec, b_spec],
            out_specs=out_spec,
            compiler_params=cp,
        )(x_p, w_mu_p, b_mu_p)
        # sample=False leaves log_q / log_p at their initial value (0).
        return out[:B, :n_out], jnp.float32(0.0), jnp.float32(0.0)

    if eps_w is None or eps_b is None:
        kw, kb = jax.random.split(jax.random.PRNGKey(int(seed)))
        if eps_w is None:
            eps_w = sigma_prior * jax.random.normal(kw, (n_in, n_out),
                                                    jnp.float32)
        if eps_b is None:
            eps_b = sigma_prior * jax.random.normal(kb, (n_out,), jnp.float32)

    # rho padded with 1.0, mu/eps with 0.0 -> padded elements contribute
    # exactly 0 to both log sums and to the matmul (no in-kernel masking).
    w_rho_p = _pad2(w_rho, k_pad, n_pad, value=1.0).astype(param_dtype)
    b_rho_p = _pad2(jnp.reshape(b_rho, (1, n_out)), 1, n_pad,
                    value=1.0).astype(param_dtype)
    eps_w_p = _pad2(eps_w, k_pad, n_pad).astype(param_dtype)
    eps_b_p = _pad2(jnp.reshape(eps_b, (1, n_out)), 1, n_pad).astype(param_dtype)

    kernel = functools.partial(_bayes_sample_kernel, sigma_prior=sigma_prior,
                               mxu_dtype=mxu_dtype)
    out, qpart, ppart = pl.pallas_call(
        kernel,
        out_shape=(jax.ShapeDtypeStruct((b_pad, n_pad), jnp.float32),
                   jax.ShapeDtypeStruct((1, n_pad), jnp.float32),
                   jax.ShapeDtypeStruct((1, n_pad), jnp.float32)),
        grid=(nj, nm, nk),
        in_specs=[x_spec, w_spec, w_spec, w_spec, b_spec, b_spec, b_spec],
        out_specs=(out_spec, part_spec, part_spec),
        compiler_params=cp,
    )(x_p, w_mu_p, w_rho_p, eps_w_p, b_mu_p, b_rho_p, eps_b_p)

    # Host-side: collapse per-lane partials, add constants with the true
    # (unpadded) element count.
    n_param = n_in * n_out + n_out
    log_q = n_param * (-0.5 * _LOG_2PI) + jnp.sum(qpart)
    log_p = (n_param * (-0.5 * _LOG_2PI - math.log(sigma_prior))
             + jnp.sum(ppart))
    return out[:B, :n_out], log_q, log_p


def _reference(x, w_mu, w_rho, b_mu, b_rho, eps_w, eps_b, sigma_prior):
    """Float64 numpy reference mirroring the PyTorch forward (sample=True)."""
    x, w_mu, w_rho, b_mu, b_rho, eps_w, eps_b = (
        np.asarray(a, dtype=np.float64)
        for a in (x, w_mu, w_rho, b_mu, b_rho, eps_w, eps_b))

    def softplus(v):
        return np.logaddexp(0.0, v)

    def log_gauss(v, mu, sigma):
        return np.sum(-0.5 * _LOG_2PI - np.log(sigma)
                      - 0.5 * (v - mu) ** 2 / sigma ** 2)

    w = w_mu + softplus(w_rho) * eps_w
    b = b_mu + softplus(b_rho) * eps_b
    with np.errstate(invalid="ignore", divide="ignore"):
        log_q = log_gauss(w, w_mu, w_rho) + log_gauss(b, b_mu, b_rho)
        log_p = (log_gauss(w, 0.0, sigma_prior * np.ones_like(w))
                 + log_gauss(b, 0.0, sigma_prior * np.ones_like(b)))
    return x @ w + b, log_q, log_p


if __name__ == "__main__":
    sigma_prior = 0.1
    key = jax.random.PRNGKey(0)

    # ---- Test 1: small layer, bf16 MXU operands, pre-drawn noise ----------
    B, n_in, n_out = 8, 32, 64
    kx, kwm, kwr, kbm, kbr, kew, keb = jax.random.split(key, 7)
    x = jax.random.normal(kx, (B, n_in), jnp.float32)
    w_mu = sigma_prior * jax.random.normal(kwm, (n_in, n_out), jnp.float32)
    w_rho = sigma_prior * jax.random.normal(kwr, (n_in, n_out), jnp.float32)
    b_mu = sigma_prior * jax.random.normal(kbm, (n_out,), jnp.float32)
    b_rho = sigma_prior * jax.random.normal(kbr, (n_out,), jnp.float32)
    eps_w = sigma_prior * jax.random.normal(kew, (n_in, n_out), jnp.float32)
    eps_b = sigma_prior * jax.random.normal(keb, (n_out,), jnp.float32)

    out, log_q, log_p = bayesian_layer_forward(
        x, w_mu, w_rho, b_mu, b_rho, sigma_prior,
        eps_w=eps_w, eps_b=eps_b, sample=True, mxu_dtype=jnp.bfloat16)
    out, log_q, log_p = jax.block_until_ready((out, log_q, log_p))
    ref_out, ref_q, ref_p = _reference(x, w_mu, w_rho, b_mu, b_rho,
                                       eps_w, eps_b, sigma_prior)
    assert out.shape == (B, n_out)
    assert np.allclose(np.asarray(out), ref_out, atol=5e-2, rtol=5e-2)
    # log_q is legitimately NaN here (reference uses rho as sigma).
    assert np.allclose(np.asarray(log_q), ref_q, atol=1.0, rtol=1e-3,
                       equal_nan=True)
    assert np.allclose(np.asarray(log_p), ref_p, atol=1.0, rtol=1e-3)

    # Deterministic path: x @ w_mu + b_mu.
    out_det, _, _ = bayesian_layer_forward(
        x, w_mu, w_rho, b_mu, b_rho, sigma_prior, sample=False,
        mxu_dtype=jnp.float32)
    out_det = jax.block_until_ready(out_det)
    det_ref = (np.asarray(x, np.float64) @ np.asarray(w_mu, np.float64)
               + np.asarray(b_mu, np.float64))
    assert np.allclose(np.asarray(out_det), det_ref, atol=5e-3, rtol=1e-3)

    # ---- Test 2: multi-tile grid (nj=3, nm=2, nk=2), f32 MXU, finite q ----
    B2, n_in2, n_out2 = 16, 256, 384
    k2 = jax.random.split(jax.random.PRNGKey(1), 7)
    x2 = jax.random.normal(k2[0], (B2, n_in2), jnp.float32)
    w_mu2 = sigma_prior * jax.random.normal(k2[1], (n_in2, n_out2), jnp.float32)
    w_rho2 = 0.3 + 0.7 * jax.random.uniform(k2[2], (n_in2, n_out2), jnp.float32)
    b_mu2 = sigma_prior * jax.random.normal(k2[3], (n_out2,), jnp.float32)
    b_rho2 = 0.3 + 0.7 * jax.random.uniform(k2[4], (n_out2,), jnp.float32)
    eps_w2 = sigma_prior * jax.random.normal(k2[5], (n_in2, n_out2), jnp.float32)
    eps_b2 = sigma_prior * jax.random.normal(k2[6], (n_out2,), jnp.float32)

    out2, lq2, lp2 = bayesian_layer_forward(
        x2, w_mu2, w_rho2, b_mu2, b_rho2, sigma_prior,
        eps_w=eps_w2, eps_b=eps_b2, sample=True,
        mxu_dtype=jnp.float32, block_m=8, block_k=128, block_n=128)
    out2, lq2, lp2 = jax.block_until_ready((out2, lq2, lp2))
    r_out2, r_q2, r_p2 = _reference(x2, w_mu2, w_rho2, b_mu2, b_rho2,
                                    eps_w2, eps_b2, sigma_prior)
    assert np.allclose(np.asarray(out2), r_out2, atol=2e-2, rtol=2e-2)
    assert np.isfinite(r_q2)
    assert np.allclose(np.asarray(lq2), r_q2, atol=50.0, rtol=3e-3)
    assert np.allclose(np.asarray(lp2), r_p2, atol=20.0, rtol=2e-3)

    # ---- Test 3: host-drawn noise via seed (no eps inputs supplied) -------
    out3, lq3, lp3 = bayesian_layer_forward(
        x, w_mu, w_rho, b_mu, b_rho, sigma_prior, seed=123, sample=True,
        mxu_dtype=jnp.bfloat16)
    out3, lq3, lp3 = jax.block_until_ready((out3, lq3, lp3))
    kw3, kb3 = jax.random.split(jax.random.PRNGKey(123))
    eps_w3 = sigma_prior * jax.random.normal(kw3, (n_in, n_out), jnp.float32)
    eps_b3 = sigma_prior * jax.random.normal(kb3, (n_out,), jnp.float32)
    r_out3, _, r_p3 = _reference(x, w_mu, w_rho, b_mu, b_rho,
                                 eps_w3, eps_b3, sigma_prior)
    assert out3.shape == (B, n_out)
    assert np.allclose(np.asarray(out3), r_out3, atol=5e-2, rtol=5e-2)
    assert np.allclose(np.asarray(lp3), r_p3, atol=1.0, rtol=1e-3)
    assert bool(jnp.isfinite(out3).all())

    print("KERNEL_OK")
</pallas_src>

<mosaic_0001>
module attributes {stable_mosaic.version = 11 : i64} {
  func.func @_bayes_sample_kernel(%arg0: i32, %arg1: i32, %arg2: i32, %arg3: memref<8x128xbf16, #tpu.memory_space<vmem>>, %arg4: memref<128x128xf32, #tpu.memory_space<vmem>>, %arg5: memref<128x128xf32, #tpu.memory_space<vmem>>, %arg6: memref<128x128xf32, #tpu.memory_space<vmem>>, %arg7: memref<1x128xf32, #tpu.memory_space<vmem>>, %arg8: memref<1x128xf32, #tpu.memory_space<vmem>>, %arg9: memref<1x128xf32, #tpu.memory_space<vmem>>, %arg10: memref<8x128xf32, #tpu.memory_space<vmem>>, %arg11: memref<1x128xf32, #tpu.memory_space<vmem>>, %arg12: memref<1x128xf32, #tpu.memory_space<vmem>>) attributes {dimension_semantics = [#tpu.dimension_semantics<parallel>, #tpu.dimension_semantics<arbitrary>, #tpu.dimension_semantics<arbitrary>], iteration_bounds = array<i64: 1, 1, 1>, scalar_prefetch = 0 : i64, scratch_operands = 0 : i64, tpu.core_type = #tpu.core_type<tc>, window_params = [{transform_indices = @transform_0, window_bounds = array<i64: 8, 128>}, {transform_indices = @transform_1, window_bounds = array<i64: 128, 128>}, {transform_indices = @transform_2, window_bounds = array<i64: 128, 128>}, {transform_indices = @transform_3, window_bounds = array<i64: 128, 128>}, {transform_indices = @transform_4, window_bounds = array<i64: 1, 128>}, {transform_indices = @transform_5, window_bounds = array<i64: 1, 128>}, {transform_indices = @transform_6, window_bounds = array<i64: 1, 128>}, {transform_indices = @transform_7, window_bounds = array<i64: 8, 128>}, {transform_indices = @transform_8, window_bounds = array<i64: 1, 128>}, {transform_indices = @transform_9, window_bounds = array<i64: 1, 128>}]} {
    %c0_i32 = arith.constant 0 : i32
    %0 = arith.cmpi eq, %arg2, %c0_i32 : i32
    %1 = arith.extui %0 : i1 to i32
    %c0_i32_0 = arith.constant 0 : i32
    %2 = arith.cmpi ne, %1, %c0_i32_0 : i32
    scf.if %2 {
      %cst_18 = arith.constant 0.000000e+00 : f32
      %28 = vector.broadcast %cst_18 : f32 to vector<8x128xf32>
      %c0_19 = arith.constant 0 : index
      %c0_20 = arith.constant 0 : index
      %29 = vector.load %arg10[%c0_19, %c0_20] : memref<8x128xf32, #tpu.memory_space<vmem>>, vector<8x128xf32>
      tpu.vector_store %arg10[%c0_19, %c0_20], %28 {strides = array<i32>} : memref<8x128xf32, #tpu.memory_space<vmem>>, vector<8x128xf32>,
    } else {
    }
    %c0 = arith.constant 0 : index
    %c0_1 = arith.constant 0 : index
    %3 = vector.load %arg4[%c0, %c0_1] : memref<128x128xf32, #tpu.memory_space<vmem>>, vector<128x128xf32>
    %c0_2 = arith.constant 0 : index
    %c0_3 = arith.constant 0 : index
    %4 = vector.load %arg5[%c0_2, %c0_3] : memref<128x128xf32, #tpu.memory_space<vmem>>, vector<128x128xf32>
    %c0_4 = arith.constant 0 : index
    %c0_5 = arith.constant 0 : index
    %5 = vector.load %arg6[%c0_4, %c0_5] : memref<128x128xf32, #tpu.memory_space<vmem>>, vector<128x128xf32>
    %cst = arith.constant 0.000000e+00 : f32
    %6 = vector.broadcast %cst : f32 to vector<128x128xf32>
    %7 = arith.maximumf %4, %6 : vector<128x128xf32>
    %8 = math.absf %4 : vector<128x128xf32>
    %cst_6 = arith.constant 0.000000e+00 : f32
    %9 = vector.broadcast %cst_6 : f32 to vector<128x128xf32>
    %10 = arith.subf %9, %8 : vector<128x128xf32>
    %11 = math.exp %10 : vector<128x128xf32>
    %12 = math.log1p %11 : vector<128x128xf32>
    %13 = arith.addf %7, %12 : vector<128x128xf32>
    %14 = arith.mulf %13, %5 : vector<128x128xf32>
    %15 = arith.addf %3, %14 : vector<128x128xf32>
    %c0_7 = arith.constant 0 : index
    %c0_8 = arith.constant 0 : index
    %16 = vector.load %arg10[%c0_7, %c0_8] : memref<8x128xf32, #tpu.memory_space<vmem>>, vector<8x128xf32>
    %c0_9 = arith.constant 0 : index
    %c0_10 = arith.constant 0 : index
    %17 = vector.load %arg3[%c0_9, %c0_10] : memref<8x128xbf16, #tpu.memory_space<vmem>>, vector<8x128xbf16>
    %18 = arith.truncf %15 : vector<128x128xf32> to vector<128x128xbf16>
    %cst_11 = arith.constant dense<0.000000e+00> : vector<8x128xf32>
    %19 = tpu.matmul %17, %18, %cst_11 {dimension_numbers = #tpu.dot_dimension_numbers<[1], [0], [0], [1], [0, 0, 1, 1], [], []>} : vector<8x128xbf16>, vector<128x128xbf16>, vector<8x128xf32> -> vector<8x128xf32>
    %20 = arith.addf %16, %19 : vector<8x128xf32>
    %c0_12 = arith.constant 0 : index
    %c0_13 = arith.constant 0 : index
    %21 = vector.load %arg10[%c0_12, %c0_13] : memref<8x128xf32, #tpu.memory_space<vmem>>, vector<8x128xf32>
    tpu.vector_store %arg10[%c0_12, %c0_13], %20 {strides = array<i32>} : memref<8x128xf32, #tpu.memory_space<vmem>>, vector<8x128xf32>,
    %c0_i32_14 = arith.constant 0 : i32
    %22 = arith.cmpi eq, %arg1, %c0_i32_14 : i32
    %23 = arith.extui %22 : i1 to i32
    %c0_i32_15 = arith.constant 0 : i32
    %24 = arith.cmpi ne, %23, %c0_i32_15 : i32
    scf.if %24 {
      %c0_i32_18 = arith.constant 0 : i32
      %28 = arith.cmpi eq, %arg2, %c0_i32_18 : i32
      %29 = arith.extui %28 : i1 to i32
      %c0_i32_19 = arith.constant 0 : i32
      %30 = arith.cmpi ne, %29, %c0_i32_19 : i32
      scf.if %30 {
        %cst_34 = arith.constant 0.000000e+00 : f32
        %54 = vector.broadcast %cst_34 : f32 to vector<1x128xf32>
        %c0_35 = arith.constant 0 : index
        %c0_36 = arith.constant 0 : index
        %55 = vector.load %arg11[%c0_35, %c0_36] : memref<1x128xf32, #tpu.memory_space<vmem>>, vector<1x128xf32>
        tpu.vector_store %arg11[%c0_35, %c0_36], %54 {strides = array<i32>} : memref<1x128xf32, #tpu.memory_space<vmem>>, vector<1x128xf32>,
        %cst_37 = arith.constant 0.000000e+00 : f32
        %56 = vector.broadcast %cst_37 : f32 to vector<1x128xf32>
        %c0_38 = arith.constant 0 : index
        %c0_39 = arith.constant 0 : index
        %57 = vector.load %arg12[%c0_38, %c0_39] : memref<1x128xf32, #tpu.memory_space<vmem>>, vector<1x128xf32>
        tpu.vector_store %arg12[%c0_38, %c0_39], %56 {strides = array<i32>} : memref<1x128xf32, #tpu.memory_space<vmem>>, vector<1x128xf32>,
      } else {
      }
      %cst_20 = arith.constant 1.000000e+00 : f32
      %31 = vector.broadcast %cst_20 : f32 to vector<128x128xf32>
      %32 = arith.divf %31, %4 : vector<128x128xf32>
      %33 = math.log %4 : vector<128x128xf32>
      %cst_21 = arith.constant 0.000000e+00 : f32
      %34 = vector.broadcast %cst_21 : f32 to vector<128x128xf32>
      %35 = arith.subf %34, %33 : vector<128x128xf32>
      %36 = arith.mulf %14, %32 : vector<128x128xf32>
      %37 = arith.mulf %36, %36 : vector<128x128xf32>
      %cst_22 = arith.constant 5.000000e-01 : f32
      %38 = vector.broadcast %cst_22 : f32 to vector<128x128xf32>
      %39 = arith.mulf %38, %37 : vector<128x128xf32>
      %40 = arith.subf %35, %39 : vector<128x128xf32>
      %41 = arith.mulf %15, %15 : vector<128x128xf32>
      %cst_23 = arith.constant -5.000000e+01 : f32
      %42 = vector.broadcast %cst_23 : f32 to vector<128x128xf32>
      %43 = arith.mulf %42, %41 : vector<128x128xf32>
      %c0_24 = arith.constant 0 : index
      %c0_25 = arith.constant 0 : index
      %44 = vector.load %arg11[%c0_24, %c0_25] : memref<1x128xf32, #tpu.memory_space<vmem>>, vector<1x128xf32>
      %cst_26 = arith.constant dense<0.000000e+00> : vector<128xf32>
      %45 = vector.multi_reduction <add>, %40, %cst_26 [0] : vector<128x128xf32> to vector<128xf32>
      %46 = vector.shape_cast %45 : vector<128xf32> to vector<1x128xf32>
      %47 = arith.addf %44, %46 : vector<1x128xf32>
      %c0_27 = arith.constant 0 : index
      %c0_28 = arith.constant 0 : index
      %48 = vector.load %arg11[%c0_27, %c0_28] : memref<1x128xf32, #tpu.memory_space<vmem>>, vector<1x128xf32>
      tpu.vector_store %arg11[%c0_27, %c0_28], %47 {strides = array<i32>} : memref<1x128xf32, #tpu.memory_space<vmem>>, vector<1x128xf32>,
      %c0_29 = arith.constant 0 : index
      %c0_30 = arith.constant 0 : index
      %49 = vector.load %arg12[%c0_29, %c0_30] : memref<1x128xf32, #tpu.memory_space<vmem>>, vector<1x128xf32>
      %cst_31 = arith.constant dense<0.000000e+00> : vector<128xf32>
      %50 = vector.multi_reduction <add>, %43, %cst_31 [0] : vector<128x128xf32> to vector<128xf32>
      %51 = vector.shape_cast %50 : vector<128xf32> to vector<1x128xf32>
      %52 = arith.addf %49, %51 : vector<1x128xf32>
      %c0_32 = arith.constant 0 : index
      %c0_33 = arith.constant 0 : index
      %53 = vector.load %arg12[%c0_32, %c0_33] : memref<1x128xf32, #tpu.memory_space<vmem>>, vector<1x128xf32>
      tpu.vector_store %arg12[%c0_32, %c0_33], %52 {strides = array<i32>} : memref<1x128xf32, #tpu.memory_space<vmem>>, vector<1x128xf32>,
    } else {
    }
    %c0_i32_16 = arith.constant 0 : i32
    %25 = arith.cmpi eq, %arg2, %c0_i32_16 : i32
    %26 = arith.extui %25 : i1 to i32
    %c0_i32_17 = arith.constant 0 : i32
    %27 = arith.cmpi ne, %26, %c0_i32_17 : i32
    scf.if %27 {
      %c0_18 = arith.constant 0 : index
      %c0_19 = arith.constant 0 : index
      %28 = vector.load %arg7[%c0_18, %c0_19] : memref<1x128xf32, #tpu.memory_space<vmem>>, vector<1x128xf32>
      %c0_20 = arith.constant 0 : index
      %c0_21 = arith.constant 0 : index
      %29 = vector.load %arg8[%c0_20, %c0_21] : memref<1x128xf32, #tpu.memory_space<vmem>>, vector<1x128xf32>
      %c0_22 = arith.constant 0 : index
      %c0_23 = arith.constant 0 : index
      %30 = vector.load %arg9[%c0_22, %c0_23] : memref<1x128xf32, #tpu.memory_space<vmem>>, vector<1x128xf32>
      %cst_24 = arith.constant 0.000000e+00 : f32
      %31 = vector.broadcast %cst_24 : f32 to vector<1x128xf32>
      %32 = arith.maximumf %29, %31 : vector<1x128xf32>
      %33 = math.absf %29 : vector<1x128xf32>
      %cst_25 = arith.constant 0.000000e+00 : f32
      %34 = vector.broadcast %cst_25 : f32 to vector<1x128xf32>
      %35 = arith.subf %34, %33 : vector<1x128xf32>
      %36 = math.exp %35 : vector<1x128xf32>
      %37 = math.log1p %36 : vector<1x128xf32>
      %38 = arith.addf %32, %37 : vector<1x128xf32>
      %39 = arith.mulf %38, %30 : vector<1x128xf32>
      %40 = arith.addf %28, %39 : vector<1x128xf32>
      %c0_26 = arith.constant 0 : index
      %c0_27 = arith.constant 0 : index
      %41 = vector.load %arg10[%c0_26, %c0_27] : memref<8x128xf32, #tpu.memory_space<vmem>>, vector<8x128xf32>
      %42 = vector.broadcast %40 : vector<1x128xf32> to vector<8x128xf32>
      %43 = arith.addf %41, %42 : vector<8x128xf32>
      %c0_28 = arith.constant 0 : index
      %c0_29 = arith.constant 0 : index
      %44 = vector.load %arg10[%c0_28, %c0_29] : memref<8x128xf32, #tpu.memory_space<vmem>>, vector<8x128xf32>
      tpu.vector_store %arg10[%c0_28, %c0_29], %43 {strides = array<i32>} : memref<8x128xf32, #tpu.memory_space<vmem>>, vector<8x128xf32>,
      %c0_i32_30 = arith.constant 0 : i32
      %45 = arith.cmpi eq, %arg1, %c0_i32_30 : i32
      %46 = arith.extui %45 : i1 to i32
      %c0_i32_31 = arith.constant 0 : i32
      %47 = arith.cmpi ne, %46, %c0_i32_31 : i32
      scf.if %47 {
        %c0_32 = arith.constant 0 : index
        %c0_33 = arith.constant 0 : index
        %48 = vector.load %arg11[%c0_32, %c0_33] : memref<1x128xf32, #tpu.memory_space<vmem>>, vector<1x128xf32>
        %49 = math.log %29 : vector<1x128xf32>
        %cst_34 = arith.constant 0.000000e+00 : f32
        %50 = vector.broadcast %cst_34 : f32 to vector<1x128xf32>
        %51 = arith.subf %50, %49 : vector<1x128xf32>
        %52 = arith.divf %39, %29 : vector<1x128xf32>
        %53 = arith.mulf %52, %52 : vector<1x128xf32>
        %cst_35 = arith.constant 5.000000e-01 : f32
        %54 = vector.broadcast %cst_35 : f32 to vector<1x128xf32>
        %55 = arith.mulf %54, %53 : vector<1x128xf32>
        %56 = arith.subf %51, %55 : vector<1x128xf32>
        %57 = arith.addf %48, %56 : vector<1x128xf32>
        %c0_36 = arith.constant 0 : index
        %c0_37 = arith.constant 0 : index
        %58 = vector.load %arg11[%c0_36, %c0_37] : memref<1x128xf32, #tpu.memory_space<vmem>>, vector<1x128xf32>
        tpu.vector_store %arg11[%c0_36, %c0_37], %57 {strides = array<i32>} : memref<1x128xf32, #tpu.memory_space<vmem>>, vector<1x128xf32>,
        %c0_38 = arith.constant 0 : index
        %c0_39 = arith.constant 0 : index
        %59 = vector.load %arg12[%c0_38, %c0_39] : memref<1x128xf32, #tpu.memory_space<vmem>>, vector<1x128xf32>
        %60 = arith.mulf %40, %40 : vector<1x128xf32>
        %cst_40 = arith.constant -5.000000e+01 : f32
        %61 = vector.broadcast %cst_40 : f32 to vector<1x128xf32>
        %62 = arith.mulf %61, %60 : vector<1x128xf32>
        %63 = arith.addf %59, %62 : vector<1x128xf32>
        %c0_41 = arith.constant 0 : index
        %c0_42 = arith.constant 0 : index
        %64 = vector.load %arg12[%c0_41, %c0_42] : memref<1x128xf32, #tpu.memory_space<vmem>>, vector<1x128xf32>
        tpu.vector_store %arg12[%c0_41, %c0_42], %63 {strides = array<i32>} : memref<1x128xf32, #tpu.memory_space<vmem>>, vector<1x128xf32>,
      } else {
      }
    } else {
    }
    return
  }
  func.func @transform_0(%arg0: i32, %arg1: i32, %arg2: i32) -> (i32, i32) {
    %c0_i32 = arith.constant 0 : i32
    return %arg1, %arg2 : i32, i32
  }
  func.func @transform_1(%arg0: i32, %arg1: i32, %arg2: i32) -> (i32, i32) {
    %c0_i32 = arith.constant 0 : i32
    return %arg2, %arg0 : i32, i32
  }
  func.func @transform_2(%arg0: i32, %arg1: i32, %arg2: i32) -> (i32, i32) {
    %c0_i32 = arith.constant 0 : i32
    return %arg2, %arg0 : i32, i32
  }
  func.func @transform_3(%arg0: i32, %arg1: i32, %arg2: i32) -> (i32, i32) {
    %c0_i32 = arith.constant 0 : i32
    return %arg2, %arg0 : i32, i32
  }
  func.func @transform_4(%arg0: i32, %arg1: i32, %arg2: i32) -> (i32, i32) {
    %c0_i32 = arith.constant 0 : i32
    %c0_i32_0 = arith.constant 0 : i32
    return %c0_i32, %arg0 : i32, i32
  }
  func.func @transform_5(%arg0: i32, %arg1: i32, %arg2: i32) -> (i32, i32) {
    %c0_i32 = arith.constant 0 : i32
    %c0_i32_0 = arith.constant 0 : i32
    return %c0_i32, %arg0 : i32, i32
  }
  func.func @transform_6(%arg0: i32, %arg1: i32, %arg2: i32) -> (i32, i32) {
    %c0_i32 = arith.constant 0 : i32
    %c0_i32_0 = arith.constant 0 : i32
    return %c0_i32, %arg0 : i32, i32
  }
  func.func @transform_7(%arg0: i32, %arg1: i32, %arg2: i32) -> (i32, i32) {
    %c0_i32 = arith.constant 0 : i32
    return %arg1, %arg0 : i32, i32
  }
  func.func @transform_8(%arg0: i32, %arg1: i32, %arg2: i32) -> (i32, i32) {
    %c0_i32 = arith.constant 0 : i32
    %c0_i32_0 = arith.constant 0 : i32
    return %c0_i32, %arg0 : i32, i32
  }
  func.func @transform_9(%arg0: i32, %arg1: i32, %arg2: i32) -> (i32, i32) {
    %c0_i32 = arith.constant 0 : i32
    %c0_i32_0 = arith.constant 0 : i32
    return %c0_i32, %arg0 : i32, i32
  }
}

</mosaic_0001>

<llo_original>
// kernel: tpu_custom_call.1
$region0: #{tpu_custom_call.1}
  #allocation0 [shape = 'u32[]', space=smem, size = 0x4, offset = 0x4, fixed_abs, tag = 'smem constant byte address 0x4 - core index']
  #allocation1 [shape = 'u32[144,128]{1,0:T(1,128)}', space=vmem, size = 0x12000, scoped, tag = 'internal scratch']
  %s0 = inlined_call_operand.hbm [shape: bf16[8,128], index: 0, kind: input, shape index: {}]
  %s1 = inlined_call_operand.hbm [shape: f32[128,128], index: 1, kind: input, shape index: {}]
  %s2 = inlined_call_operand.hbm [shape: f32[128,128], index: 2, kind: input, shape index: {}]
  %s3 = inlined_call_operand.hbm [shape: f32[128,128], index: 3, kind: input, shape index: {}]
  %s4 = inlined_call_operand.vmem [shape: f32[1,128], index: 4, kind: input, shape index: {}]
  %s5 = inlined_call_operand.vmem [shape: f32[1,128], index: 5, kind: input, shape index: {}]
  %s6 = inlined_call_operand.vmem [shape: f32[1,128], index: 6, kind: input, shape index: {}]
  %s7 = inlined_call_operand.hbm [shape: f32[8,128], index: 7, kind: output, shape index: {0}]
  %s8 = inlined_call_operand.hbm [shape: f32[1,128], index: 8, kind: output, shape index: {1}]
  %s9 = inlined_call_operand.hbm [shape: f32[1,128], index: 9, kind: output, shape index: {2}]
  %10 = xla_tuple %s7, %s8, %s9
  %s11 = sld [smem:[#allocation0]]
  $region90: #{tpu_custom_call.1} parent=0
    _
  %s13 = ssub.s32 1, %s11
  %s14 = scalar_select 0, %s13, %s11
  $region1: #{tpu_custom_call.1} parent=0
    #allocation2 [shape = 'u8[2048]{0}', space=vmem, size = 0x800, scoped, tag = 'input window, operand 0, single buffered']
    #allocation3 [shape = 's32[1]{0}', space=sflag, size = 0x4, scoped, tag = 'scoped memory for tpu_custom_call.1']
    #allocation4 [shape = 's32[1]{0}', space=sflag, size = 0x4, scoped, tag = 'scoped memory for tpu_custom_call.1']
    #allocation5 [shape = 'u8[65536]{0}', space=vmem, size = 0x10000, scoped, tag = 'input window, operand 1, single buffered']
    #allocation6 [shape = 's32[1]{0}', space=sflag, size = 0x4, scoped, tag = 'scoped memory for tpu_custom_call.1']
    #allocation7 [shape = 'u8[65536]{0}', space=vmem, size = 0x10000, scoped, tag = 'input window, operand 2, single buffered']
    #allocation8 [shape = 'u8[65536]{0}', space=vmem, size = 0x10000, scoped, tag = 'input window, operand 3, single buffered']
    #allocation9 [shape = 's32[1]{0}', space=sflag, size = 0x4, scoped, tag = 'scoped memory for tpu_custom_call.1']
    #allocation10 [shape = 'u8[4096]{0}', space=vmem, size = 0x1000, scoped, tag = 'output window, operand 0, single buffered']
    #allocation11 [shape = 'u8[512]{0}', space=vmem, size = 0x400, scoped, tag = 'output window, operand 1, single buffered']
    #allocation12 [shape = 's32[1]{0}', space=sflag, size = 0x4, scoped, tag = 'scoped memory for tpu_custom_call.1']
    #allocation13 [shape = 'u8[512]{0}', space=vmem, size = 0x400, scoped, tag = 'output window, operand 2, single buffered']
    %15 = vsyncpa [#allocation3], 0
    %16 = vsyncpa [#allocation6], 0
    %17 = vsyncpa [#allocation9], 0
    %18 = vsyncpa [#allocation4], 0
    %19 = vsyncpa [#allocation12], 0
    // Predicated region
    $region2: #{tpu_custom_call.1} parent=1 // pred_check
      _
    $region3: #{tpu_custom_call.1} parent=1 // pred_check_branch
      %21 = sbr.rel (0) target = $region5
    $region4: #{tpu_custom_call.1} parent=1 // pred_region
      %s23 = ssub.s32 64, 64
      %24 = vsyncadd [#allocation3], %s23
      %s26 = sshll.u32 [#allocation2], 4
      %s27 = int_to_ptr.vmem [resolvable:$true] %s26
      %29 = dma.hbm_to_vmem [thread:$0]  %s0, 64, %s27, [#allocation3]
    $region5: #{tpu_custom_call.1} parent=1 // pred_fallthru
      _
    // Predicated region
    $region6: #{tpu_custom_call.1} parent=1 // pred_check
      _
    $region7: #{tpu_custom_call.1} parent=1 // pred_check_branch
      %31 = sbr.rel (0) target = $region9
    $region8: #{tpu_custom_call.1} parent=1 // pred_region
      %s33 = ssub.s32 2048, 2048
      %34 = vsyncadd [#allocation6], %s33
      %s35 = sshll.u32 [#allocation5], 4
      %s36 = int_to_ptr.vmem [resolvable:$true] %s35
      %41 = dma.hbm_to_vmem [thread:$0]  %s1, 2048, %s36, [#allocation6], 128, 128, 8
    $region9: #{tpu_custom_call.1} parent=1 // pred_fallthru
      _
    // Predicated region
    $region10: #{tpu_custom_call.1} parent=1 // pred_check
      _
    $region11: #{tpu_custom_call.1} parent=1 // pred_check_branch
      %43 = sbr.rel (0) target = $region13
    $region12: #{tpu_custom_call.1} parent=1 // pred_region
      %s45 = ssub.s32 2048, 2048
      %46 = vsyncadd [#allocation6], %s45
      %s47 = sshll.u32 [#allocation7], 4
      %s48 = int_to_ptr.vmem [resolvable:$true] %s47
      %53 = dma.hbm_to_vmem [thread:$0]  %s2, 2048, %s48, [#allocation6], 128, 128, 8
    $region13: #{tpu_custom_call.1} parent=1 // pred_fallthru
      _
    // Predicated region
    $region14: #{tpu_custom_call.1} parent=1 // pred_check
      _
    $region15: #{tpu_custom_call.1} parent=1 // pred_check_branch
      %55 = sbr.rel (0) target = $region17
    $region16: #{tpu_custom_call.1} parent=1 // pred_region
      %s57 = ssub.s32 2048, 2048
      %58 = vsyncadd [#allocation9], %s57
      %s59 = sshll.u32 [#allocation8], 4
      %s60 = int_to_ptr.vmem [resolvable:$true] %s59
      %65 = dma.hbm_to_vmem [thread:$0]  %s3, 2048, %s60, [#allocation9], 128, 128, 8
    $region17: #{tpu_custom_call.1} parent=1 // pred_fallthru
      _
    // Predicated region
    $region18: #{tpu_custom_call.1} parent=1 // pred_check
      _
    $region19: #{tpu_custom_call.1} parent=1 // pred_check_branch
      %67 = sbr.rel (0) target = $region21
    $region20: #{tpu_custom_call.1} parent=1 // pred_region
      _
    $region21: #{tpu_custom_call.1} parent=1 // pred_fallthru
      _
    // Predicated region
    $region22: #{tpu_custom_call.1} parent=1 // pred_check
      _
    $region23: #{tpu_custom_call.1} parent=1 // pred_check_branch
      %69 = sbr.rel (0) target = $region25
    $region24: #{tpu_custom_call.1} parent=1 // pred_region
      _
    $region25: #{tpu_custom_call.1} parent=1 // pred_fallthru
      _
    // Predicated region
    $region26: #{tpu_custom_call.1} parent=1 // pred_check
      _
    $region27: #{tpu_custom_call.1} parent=1 // pred_check_branch
      %71 = sbr.rel (0) target = $region29
    $region28: #{tpu_custom_call.1} parent=1 // pred_region
      _
    $region29: #{tpu_custom_call.1} parent=1 // pred_fallthru
      _
    // Predicated region
    $region30: #{tpu_custom_call.1} parent=1 // pred_check
      _
    $region31: #{tpu_custom_call.1} parent=1 // pred_check_branch
      %73 = sbr.rel (0) target = $region33
    $region32: #{tpu_custom_call.1} parent=1 // pred_region
      %74 = dma.done [#allocation3], 64
    $region33: #{tpu_custom_call.1} parent=1 // pred_fallthru
      _
    // Predicated region
    $region34: #{tpu_custom_call.1} parent=1 // pred_check
      _
    $region35: #{tpu_custom_call.1} parent=1 // pred_check_branch
      %76 = sbr.rel (0) target = $region37
    $region36: #{tpu_custom_call.1} parent=1 // pred_region
      %77 = dma.done [#allocation6], 2048
    $region37: #{tpu_custom_call.1} parent=1 // pred_fallthru
      _
    // Predicated region
    $region38: #{tpu_custom_call.1} parent=1 // pred_check
      _
    $region39: #{tpu_custom_call.1} parent=1 // pred_check_branch
      %79 = sbr.rel (0) target = $region41
    $region40: #{tpu_custom_call.1} parent=1 // pred_region
      %80 = dma.done [#allocation6], 2048
    $region41: #{tpu_custom_call.1} parent=1 // pred_fallthru
      _
    // Predicated region
    $region42: #{tpu_custom_call.1} parent=1 // pred_check
      _
    $region43: #{tpu_custom_call.1} parent=1 // pred_check_branch
      %82 = sbr.rel (0) target = $region45
    $region44: #{tpu_custom_call.1} parent=1 // pred_region
      %83 = dma.done [#allocation9], 2048
    $region45: #{tpu_custom_call.1} parent=1 // pred_fallthru
      _
    %p85 = scmp.eq.s32.totalorder 0, 0
    // Predicated region
    $region46: #{tpu_custom_call.1} parent=1 // pred_check
      %p86 = pneg %p85
    $region47: #{tpu_custom_call.1} parent=1 // pred_check_branch
      %88 = sbr.rel (%p86) target = $region49
    $region48: #{tpu_custom_call.1} parent=1 // pred_region
      %89 = vst [vmem:[#allocation10] sm:$0xff] 0.0
    $region49: #{tpu_custom_call.1} parent=1 // pred_fallthru
      _
    %v90 = vld [vmem:[#allocation5] sm:$0xff]
    %v91 = vld [vmem:[#allocation5 + $0x8] sm:$0xff]
    %v92 = vld [vmem:[#allocation5 + $0x10] sm:$0xff]
    %v93 = vld [vmem:[#allocation5 + $0x18] sm:$0xff]
    %v94 = vld [vmem:[#allocation5 + $0x20] sm:$0xff]
    %v95 = vld [vmem:[#allocation5 + $0x28] sm:$0xff]
    %v96 = vld [vmem:[#allocation5 + $0x30] sm:$0xff]
    %v97 = vld [vmem:[#allocation5 + $0x38] sm:$0xff]
    %v98 = vld [vmem:[#allocation5 + $0x40] sm:$0xff]
    %v99 = vld [vmem:[#allocation5 + $0x48] sm:$0xff]
    %v100 = vld [vmem:[#allocation5 + $0x50] sm:$0xff]
    %v101 = vld [vmem:[#allocation5 + $0x58] sm:$0xff]
    %v102 = vld [vmem:[#allocation5 + $0x60] sm:$0xff]
    %v103 = vld [vmem:[#allocation5 + $0x68] sm:$0xff]
    %v104 = vld [vmem:[#allocation5 + $0x70] sm:$0xff]
    %v105 = vld [vmem:[#allocation5 + $0x78] sm:$0xff]
    %v106 = vld [vmem:[#allocation7] sm:$0xff]
    %v107 = vld [vmem:[#allocation7 + $0x8] sm:$0xff]
    %v108 = vld [vmem:[#allocation7 + $0x10] sm:$0xff]
    %v109 = vld [vmem:[#allocation7 + $0x18] sm:$0xff]
    %v110 = vld [vmem:[#allocation7 + $0x20] sm:$0xff]
    %v111 = vld [vmem:[#allocation7 + $0x28] sm:$0xff]
    %v112 = vld [vmem:[#allocation7 + $0x30] sm:$0xff]
    %v113 = vld [vmem:[#allocation7 + $0x38] sm:$0xff]
    %v114 = vld [vmem:[#allocation7 + $0x40] sm:$0xff]
    %v115 = vld [vmem:[#allocation7 + $0x48] sm:$0xff]
    %v116 = vld [vmem:[#allocation7 + $0x50] sm:$0xff]
    %v117 = vld [vmem:[#allocation7 + $0x58] sm:$0xff]
    %v118 = vld [vmem:[#allocation7 + $0x60] sm:$0xff]
    %v119 = vld [vmem:[#allocation7 + $0x68] sm:$0xff]
    %v120 = vld [vmem:[#allocation7 + $0x70] sm:$0xff]
    %v121 = vld [vmem:[#allocation7 + $0x78] sm:$0xff]
    %v122 = vld [vmem:[#allocation8] sm:$0xff]
    %v123 = vld [vmem:[#allocation8 + $0x8] sm:$0xff]
    %v124 = vld [vmem:[#allocation8 + $0x10] sm:$0xff]
    %v125 = vld [vmem:[#allocation8 + $0x18] sm:$0xff]
    %v126 = vld [vmem:[#allocation8 + $0x20] sm:$0xff]
    %v127 = vld [vmem:[#allocation8 + $0x28] sm:$0xff]
    %v128 = vld [vmem:[#allocation8 + $0x30] sm:$0xff]
    %v129 = vld [vmem:[#allocation8 + $0x38] sm:$0xff]
    %v130 = vld [vmem:[#allocation8 + $0x40] sm:$0xff]
    %v131 = vld [vmem:[#allocation8 + $0x48] sm:$0xff]
    %v132 = vld [vmem:[#allocation8 + $0x50] sm:$0xff]
    %v133 = vld [vmem:[#allocation8 + $0x58] sm:$0xff]
    %v134 = vld [vmem:[#allocation8 + $0x60] sm:$0xff]
    %v135 = vld [vmem:[#allocation8 + $0x68] sm:$0xff]
    %v136 = vld [vmem:[#allocation8 + $0x70] sm:$0xff]
    %v137 = vld [vmem:[#allocation8 + $0x78] sm:$0xff]
    %v138 = vmax.f32 %v106, 0.0
    %v139 = vmax.f32 %v107, 0.0
    %v140 = vmax.f32 %v108, 0.0
    %v141 = vmax.f32 %v109, 0.0
    %v142 = vmax.f32 %v110, 0.0
    %v143 = vmax.f32 %v111, 0.0
    %v144 = vmax.f32 %v112, 0.0
    %v145 = vmax.f32 %v113, 0.0
    %v146 = vmax.f32 %v114, 0.0
    %v147 = vmax.f32 %v115, 0.0
    %v148 = vmax.f32 %v116, 0.0
    %v149 = vmax.f32 %v117, 0.0
    %v150 = vmax.f32 %v118, 0.0
    %v151 = vmax.f32 %v119, 0.0
    %v152 = vmax.f32 %v120, 0.0
    %v153 = vmax.f32 %v121, 0.0
    %v154 = vand.u32 2147483647, %v106
    %v155 = vand.u32 2147483647, %v107
    %v156 = vand.u32 2147483647, %v108
    %v157 = vand.u32 2147483647, %v109
    %v158 = vand.u32 2147483647, %v110
    %v159 = vand.u32 2147483647, %v111
    %v160 = vand.u32 2147483647, %v112
    %v161 = vand.u32 2147483647, %v113
    %v162 = vand.u32 2147483647, %v114
    %v163 = vand.u32 2147483647, %v115
    %v164 = vand.u32 2147483647, %v116
    %v165 = vand.u32 2147483647, %v117
    %v166 = vand.u32 2147483647, %v118
    %v167 = vand.u32 2147483647, %v119
    %v168 = vand.u32 2147483647, %v120
    %v169 = vand.u32 2147483647, %v121
    %v170 = vsub.f32 0.0, %v154
    %v171 = vsub.f32 0.0, %v155
    %v172 = vsub.f32 0.0, %v156
    %v173 = vsub.f32 0.0, %v157
    %v174 = vsub.f32 0.0, %v158
    %v175 = vsub.f32 0.0, %v159
    %v176 = vsub.f32 0.0, %v160
    %v177 = vsub.f32 0.0, %v161
    %v178 = vsub.f32 0.0, %v162
    %v179 = vsub.f32 0.0, %v163
    %v180 = vsub.f32 0.0, %v164
    %v181 = vsub.f32 0.0, %v165
    %v182 = vsub.f32 0.0, %v166
    %v183 = vsub.f32 0.0, %v167
    %v184 = vsub.f32 0.0, %v168
    %v185 = vsub.f32 0.0, %v169
    %v186 = vmul.f32 %v170, 1.442695
    %v187 = vpow.pop %v186
    %v188 = vmul.f32 %v171, 1.442695
    %v189 = vpow.pop %v188
    %v190 = vmul.f32 %v172, 1.442695
    %v191 = vpow.pop %v190
    %v192 = vmul.f32 %v173, 1.442695
    %v193 = vpow.pop %v192
    %v194 = vmul.f32 %v174, 1.442695
    %v195 = vpow.pop %v194
    %v196 = vmul.f32 %v175, 1.442695
    %v197 = vpow.pop %v196
    %v198 = vmul.f32 %v176, 1.442695
    %v199 = vpow.pop %v198
    %v200 = vmul.f32 %v177, 1.442695
    %v201 = vpow.pop %v200
    %v202 = vmul.f32 %v178, 1.442695
    %v203 = vpow.pop %v202
    %v204 = vmul.f32 %v179, 1.442695
    %v205 = vpow.pop %v204
    %v206 = vmul.f32 %v180, 1.442695
    %v207 = vpow.pop %v206
    %v208 = vmul.f32 %v181, 1.442695
    %v209 = vpow.pop %v208
    %v210 = vmul.f32 %v182, 1.442695
    %v211 = vpow.pop %v210
    %v212 = vmul.f32 %v183, 1.442695
    %v213 = vpow.pop %v212
    %v214 = vmul.f32 %v184, 1.442695
    %v215 = vpow.pop %v214
    %v216 = vmul.f32 %v185, 1.442695
    %v217 = vpow.pop %v216
    %v218 = vadd.f32 %v187, 1.0
    %v219 = vlog2.pop %v218
    %v220 = vmul.f32 %v219, 0.6931472
    %v221 = vmul.f32 -0.5, %v187
    %v222 = vadd.f32 %v221, 1.0
    %v223 = vmul.f32 %v222, %v187
    %v224 = vand.u32 2147483647, %v187
    %vm225 = vcmp.lt.f32.partialorder %v224, 0.0004427343
    %v226 = vsel %vm225, %v223, %v220
    %v227 = vadd.f32 %v189, 1.0
    %v228 = vlog2.pop %v227
    %v229 = vmul.f32 %v228, 0.6931472
    %v230 = vmul.f32 -0.5, %v189
    %v231 = vadd.f32 %v230, 1.0
    %v232 = vmul.f32 %v231, %v189
    %v233 = vand.u32 2147483647, %v189
    %vm234 = vcmp.lt.f32.partialorder %v233, 0.0004427343
    %v235 = vsel %vm234, %v232, %v229
    %v236 = vadd.f32 %v191, 1.0
    %v237 = vlog2.pop %v236
    %v238 = vmul.f32 %v237, 0.6931472
    %v239 = vmul.f32 -0.5, %v191
    %v240 = vadd.f32 %v239, 1.0
    %v241 = vmul.f32 %v240, %v191
    %v242 = vand.u32 2147483647, %v191
    %vm243 = vcmp.lt.f32.partialorder %v242, 0.0004427343
    %v244 = vsel %vm243, %v241, %v238
    %v245 = vadd.f32 %v193, 1.0
    %v246 = vlog2.pop %v245
    %v247 = vmul.f32 %v246, 0.6931472
    %v248 = vmul.f32 -0.5, %v193
    %v249 = vadd.f32 %v248, 1.0
    %v250 = vmul.f32 %v249, %v193
    %v251 = vand.u32 2147483647, %v193
    %vm252 = vcmp.lt.f32.partialorder %v251, 0.0004427343
    %v253 = vsel %vm252, %v250, %v247
    %v254 = vadd.f32 %v195, 1.0
    %v255 = vlog2.pop %v254
    %v256 = vmul.f32 %v255, 0.6931472
    %v257 = vmul.f32 -0.5, %v195
    %v258 = vadd.f32 %v257, 1.0
    %v259 = vmul.f32 %v258, %v195
    %v260 = vand.u32 2147483647, %v195
    %vm261 = vcmp.lt.f32.partialorder %v260, 0.0004427343
    %v262 = vsel %vm261, %v259, %v256
    %v263 = vadd.f32 %v197, 1.0
    %v264 = vlog2.pop %v263
    %v265 = vmul.f32 %v264, 0.6931472
    %v266 = vmul.f32 -0.5, %v197
    %v267 = vadd.f32 %v266, 1.0
    %v268 = vmul.f32 %v267, %v197
    %v269 = vand.u32 2147483647, %v197
    %vm270 = vcmp.lt.f32.partialorder %v269, 0.0004427343
    %v271 = vsel %vm270, %v268, %v265
    %v272 = vadd.f32 %v199, 1.0
    %v273 = vlog2.pop %v272
    %v274 = vmul.f32 %v273, 0.6931472
    %v275 = vmul.f32 -0.5, %v199
    %v276 = vadd.f32 %v275, 1.0
    %v277 = vmul.f32 %v276, %v199
    %v278 = vand.u32 2147483647, %v199
    %vm279 = vcmp.lt.f32.partialorder %v278, 0.0004427343
    %v280 = vsel %vm279, %v277, %v274
    %v281 = vadd.f32 %v201, 1.0
    %v282 = vlog2.pop %v281
    %v283 = vmul.f32 %v282, 0.6931472
    %v284 = vmul.f32 -0.5, %v201
    %v285 = vadd.f32 %v284, 1.0
    %v286 = vmul.f32 %v285, %v201
    %v287 = vand.u32 2147483647, %v201
    %vm288 = vcmp.lt.f32.partialorder %v287, 0.0004427343
    %v289 = vsel %vm288, %v286, %v283
    %v290 = vadd.f32 %v203, 1.0
    %v291 = vlog2.pop %v290
    %v292 = vmul.f32 %v291, 0.6931472
    %v293 = vmul.f32 -0.5, %v203
    %v294 = vadd.f32 %v293, 1.0
    %v295 = vmul.f32 %v294, %v203
    %v296 = vand.u32 2147483647, %v203
    %vm297 = vcmp.lt.f32.partialorder %v296, 0.0004427343
    %v298 = vsel %vm297, %v295, %v292
    %v299 = vadd.f32 %v205, 1.0
    %v300 = vlog2.pop %v299
    %v301 = vmul.f32 %v300, 0.6931472
    %v302 = vmul.f32 -0.5, %v205
    %v303 = vadd.f32 %v302, 1.0
    %v304 = vmul.f32 %v303, %v205
    %v305 = vand.u32 2147483647, %v205
    %vm306 = vcmp.lt.f32.partialorder %v305, 0.0004427343
    %v307 = vsel %vm306, %v304, %v301
    %v308 = vadd.f32 %v207, 1.0
    %v309 = vlog2.pop %v308
    %v310 = vmul.f32 %v309, 0.6931472
    %v311 = vmul.f32 -0.5, %v207
    %v312 = vadd.f32 %v311, 1.0
    %v313 = vmul.f32 %v312, %v207
    %v314 = vand.u32 2147483647, %v207
    %vm315 = vcmp.lt.f32.partialorder %v314, 0.0004427343
    %v316 = vsel %vm315, %v313, %v310
    %v317 = vadd.f32 %v209, 1.0
    %v318 = vlog2.pop %v317
    %v319 = vmul.f32 %v318, 0.6931472
    %v320 = vmul.f32 -0.5, %v209
    %v321 = vadd.f32 %v320, 1.0
    %v322 = vmul.f32 %v321, %v209
    %v323 = vand.u32 2147483647, %v209
    %vm324 = vcmp.lt.f32.partialorder %v323, 0.0004427343
    %v325 = vsel %vm324, %v322, %v319
    %v326 = vadd.f32 %v211, 1.0
    %v327 = vlog2.pop %v326
    %v328 = vmul.f32 %v327, 0.6931472
    %v329 = vmul.f32 -0.5, %v211
    %v330 = vadd.f32 %v329, 1.0
    %v331 = vmul.f32 %v330, %v211
    %v332 = vand.u32 2147483647, %v211
    %vm333 = vcmp.lt.f32.partialorder %v332, 0.0004427343
    %v334 = vsel %vm333, %v331, %v328
    %v335 = vadd.f32 %v213, 1.0
    %v336 = vlog2.pop %v335
    %v337 = vmul.f32 %v336, 0.6931472
    %v338 = vmul.f32 -0.5, %v213
    %v339 = vadd.f32 %v338, 1.0
    %v340 = vmul.f32 %v339, %v213
    %v341 = vand.u32 2147483647, %v213
    %vm342 = vcmp.lt.f32.partialorder %v341, 0.0004427343
    %v343 = vsel %vm342, %v340, %v337
    %v344 = vadd.f32 %v215, 1.0
    %v345 = vlog2.pop %v344
    %v346 = vmul.f32 %v345, 0.6931472
    %v347 = vmul.f32 -0.5, %v215
    %v348 = vadd.f32 %v347, 1.0
    %v349 = vmul.f32 %v348, %v215
    %v350 = vand.u32 2147483647, %v215
    %vm351 = vcmp.lt.f32.partialorder %v350, 0.0004427343
    %v352 = vsel %vm351, %v349, %v346
    %v353 = vadd.f32 %v217, 1.0
    %v354 = vlog2.pop %v353
    %v355 = vmul.f32 %v354, 0.6931472
    %v356 = vmul.f32 -0.5, %v217
    %v357 = vadd.f32 %v356, 1.0
    %v358 = vmul.f32 %v357, %v217
    %v359 = vand.u32 2147483647, %v217
    %vm360 = vcmp.lt.f32.partialorder %v359, 0.0004427343
    %v361 = vsel %vm360, %v358, %v355
    %v362 = vadd.f32 %v138, %v226
    %v363 = vadd.f32 %v139, %v235
    %v364 = vadd.f32 %v140, %v244
    %v365 = vadd.f32 %v141, %v253
    %v366 = vadd.f32 %v142, %v262
    %v367 = vadd.f32 %v143, %v271
    %v368 = vadd.f32 %v144, %v280
    %v369 = vadd.f32 %v145, %v289
    %v370 = vadd.f32 %v146, %v298
    %v371 = vadd.f32 %v147, %v307
    %v372 = vadd.f32 %v148, %v316
    %v373 = vadd.f32 %v149, %v325
    %v374 = vadd.f32 %v150, %v334
    %v375 = vadd.f32 %v151, %v343
    %v376 = vadd.f32 %v152, %v352
    %v377 = vadd.f32 %v153, %v361
    %v378 = vmul.f32 %v362, %v122
    %v379 = vmul.f32 %v363, %v123
    %v380 = vmul.f32 %v364, %v124
    %v381 = vmul.f32 %v365, %v125
    %v382 = vmul.f32 %v366, %v126
    %v383 = vmul.f32 %v367, %v127
    %v384 = vmul.f32 %v368, %v128
    %v385 = vmul.f32 %v369, %v129
    %v386 = vmul.f32 %v370, %v130
    %v387 = vmul.f32 %v371, %v131
    %v388 = vmul.f32 %v372, %v132
    %v389 = vmul.f32 %v373, %v133
    %v390 = vmul.f32 %v374, %v134
    %v391 = vmul.f32 %v375, %v135
    %v392 = vmul.f32 %v376, %v136
    %v393 = vmul.f32 %v377, %v137
    %v394 = vadd.f32 %v90, %v378
    %v395 = vadd.f32 %v91, %v379
    %v396 = vadd.f32 %v92, %v380
    %v397 = vadd.f32 %v93, %v381
    %v398 = vadd.f32 %v94, %v382
    %v399 = vadd.f32 %v95, %v383
    %v400 = vadd.f32 %v96, %v384
    %v401 = vadd.f32 %v97, %v385
    %v402 = vadd.f32 %v98, %v386
    %v403 = vadd.f32 %v99, %v387
    %v404 = vadd.f32 %v100, %v388
    %v405 = vadd.f32 %v101, %v389
    %v406 = vadd.f32 %v102, %v390
    %v407 = vadd.f32 %v103, %v391
    %v408 = vadd.f32 %v104, %v392
    %v409 = vadd.f32 %v105, %v393
    %v410 = vld [vmem:[#allocation10] sm:$0xff]
    %v411 = vld [vmem:[#allocation2] sm:$0xf]
    %v412 = vpack.c.bf16 %v395, %v394
    %v413 = vpack.c.bf16 %v397, %v396
    %v414 = vpack.c.bf16 %v399, %v398
    %v415 = vpack.c.bf16 %v401, %v400
    %v416 = vpack.c.bf16 %v403, %v402
    %v417 = vpack.c.bf16 %v405, %v404
    %v418 = vpack.c.bf16 %v407, %v406
    %v419 = vpack.c.bf16 %v409, %v408
    %420 = vmatprep.subr.bf16.mxu0 0
    %421 = vmatpush1.bf16.msra.mxu0 %v419
    %422 = vmatprep.subr.bf16.mxu0 0
    %423 = vmatpush1.bf16.msra.mxu0 %v418
    %424 = vmatprep.subr.bf16.mxu0 0
    %425 = vmatpush1.bf16.msra.mxu0 %v417
    %426 = vmatprep.subr.bf16.mxu0 0
    %427 = vmatpush1.bf16.msra.mxu0 %v416
    %428 = vmatprep.subr.bf16.mxu0 0
    %429 = vmatpush1.bf16.msra.mxu0 %v415
    %430 = vmatprep.subr.bf16.mxu0 0
    %431 = vmatpush1.bf16.msra.mxu0 %v414
    %432 = vmatprep.subr.bf16.mxu0 0
    %433 = vmatpush1.bf16.msra.mxu0 %v413
    %434 = vmatprep.subr.bf16.mxu0 0
    %435 = vmatpush1.bf16.msra.mxu0 %v412
    %436 = vmatprep.subr.bf16.mxu0 0
    %437 = vmatpush2.bf16.msra.mxu0 0
    %438 = vmatprep.subr.bf16.mxu0 0
    %439 = vmatpush2.bf16.msra.mxu0 0
    %440 = vmatprep.subr.bf16.mxu0 0
    %441 = vmatpush2.bf16.msra.mxu0 0
    %442 = vmatprep.subr.bf16.mxu0 0
    %443 = vmatpush2.bf16.msra.mxu0 0
    %444 = vmatprep.subr.bf16.mxu0 0
    %445 = vmatpush2.bf16.msra.mxu0 0
    %446 = vmatprep.subr.bf16.mxu0 0
    %447 = vmatpush2.bf16.msra.mxu0 0
    %448 = vmatprep.subr.bf16.mxu0 0
    %449 = vmatpush2.bf16.msra.mxu0 0
    %450 = vmatprep.subr.bf16.mxu0 0
    %451 = vmatpush2.bf16.msra.mxu0 0
    %452 = vmatprep.mubr.bf16.mxu0 0
    %453 = vmatmul.mubr.bf16.gmra.mxu0 %v411
    %v454 = vpop.f32.mrf.mxu0
    %v455 = vadd.f32 0.0, %v454
    %v456 = vpop.f32.mrf.mxu0
    %v457 = vpop.f32.mrf.mxu0
    %v458 = vpop.f32.mrf.mxu0
    %459 = vdwg.mxu0
    %v460 = vadd.f32 %v410, %v455
    %461 = vst [vmem:[#allocation10] sm:$0xff] %v460
    %p462 = scmp.eq.s32.totalorder 0, 0
    // Predicated region
    $region50: #{tpu_custom_call.1} parent=1 // pred_check
      %p463 = pneg %p462
    $region51: #{tpu_custom_call.1} parent=1 // pred_check_branch
      %465 = sbr.rel (%p463) target = $region53
    $region52: #{tpu_custom_call.1} parent=1 // pred_region
      // Predicated region
      $region54: #{tpu_custom_call.1} parent=52 // pred_check
        %p466 = pneg %p85
      $region55: #{tpu_custom_call.1} parent=52 // pred_check_branch
        %468 = sbr.rel (%p466) target = $region57
      $region56: #{tpu_custom_call.1} parent=52 // pred_region
        %469 = vst [vmem:[#allocation11] sm:$0x1] 0.0
        %470 = vst [vmem:[#allocation13] sm:$0x1] 0.0
      $region57: #{tpu_custom_call.1} parent=52 // pred_fallthru
        _
      %v471 = vrcp.pop %v106
      %v472 = vmul.f32 1.0, %v471
      %v473 = vrcp.pop %v107
      %v474 = vmul.f32 1.0, %v473
      %v475 = vrcp.pop %v108
      %v476 = vmul.f32 1.0, %v475
      %v477 = vrcp.pop %v109
      %v478 = vmul.f32 1.0, %v477
      %v479 = vrcp.pop %v110
      %v480 = vmul.f32 1.0, %v479
      %v481 = vrcp.pop %v111
      %v482 = vmul.f32 1.0, %v481
      %v483 = vrcp.pop %v112
      %v484 = vmul.f32 1.0, %v483
      %v485 = vrcp.pop %v113
      %v486 = vmul.f32 1.0, %v485
      %v487 = vrcp.pop %v114
      %v488 = vmul.f32 1.0, %v487
      %v489 = vrcp.pop %v115
      %v490 = vmul.f32 1.0, %v489
      %v491 = vrcp.pop %v116
      %v492 = vmul.f32 1.0, %v491
      %v493 = vrcp.pop %v117
      %v494 = vmul.f32 1.0, %v493
      %v495 = vrcp.pop %v118
      %v496 = vmul.f32 1.0, %v495
      %v497 = vrcp.pop %v119
      %v498 = vmul.f32 1.0, %v497
      %v499 = vrcp.pop %v120
      %v500 = vmul.f32 1.0, %v499
      %v501 = vrcp.pop %v121
      %v502 = vmul.f32 1.0, %v501
      %v503 = vlog2.pop %v106
      %v504 = vmul.f32 %v503, 0.6931472
      %v505 = vlog2.pop %v107
      %v506 = vmul.f32 %v505, 0.6931472
      %v507 = vlog2.pop %v108
      %v508 = vmul.f32 %v507, 0.6931472
      %v509 = vlog2.pop %v109
      %v510 = vmul.f32 %v509, 0.6931472
      %v511 = vlog2.pop %v110
      %v512 = vmul.f32 %v511, 0.6931472
      %v513 = vlog2.pop %v111
      %v514 = vmul.f32 %v513, 0.6931472
      %v515 = vlog2.pop %v112
      %v516 = vmul.f32 %v515, 0.6931472
      %v517 = vlog2.pop %v113
      %v518 = vmul.f32 %v517, 0.6931472
      %v519 = vlog2.pop %v114
      %v520 = vmul.f32 %v519, 0.6931472
      %v521 = vlog2.pop %v115
      %v522 = vmul.f32 %v521, 0.6931472
      %v523 = vlog2.pop %v116
      %v524 = vmul.f32 %v523, 0.6931472
      %v525 = vlog2.pop %v117
      %v526 = vmul.f32 %v525, 0.6931472
      %v527 = vlog2.pop %v118
      %v528 = vmul.f32 %v527, 0.6931472
      %v529 = vlog2.pop %v119
      %v530 = vmul.f32 %v529, 0.6931472
      %v531 = vlog2.pop %v120
      %v532 = vmul.f32 %v531, 0.6931472
      %v533 = vlog2.pop %v121
      %v534 = vmul.f32 %v533, 0.6931472
      %v535 = vsub.f32 0.0, %v504
      %v536 = vsub.f32 0.0, %v506
      %v537 = vsub.f32 0.0, %v508
      %v538 = vsub.f32 0.0, %v510
      %v539 = vsub.f32 0.0, %v512
      %v540 = vsub.f32 0.0, %v514
      %v541 = vsub.f32 0.0, %v516
      %v542 = vsub.f32 0.0, %v518
      %v543 = vsub.f32 0.0, %v520
      %v544 = vsub.f32 0.0, %v522
      %v545 = vsub.f32 0.0, %v524
      %v546 = vsub.f32 0.0, %v526
      %v547 = vsub.f32 0.0, %v528
      %v548 = vsub.f32 0.0, %v530
      %v549 = vsub.f32 0.0, %v532
      %v550 = vsub.f32 0.0, %v534
      %v551 = vmul.f32 %v378, %v472
      %v552 = vmul.f32 %v379, %v474
      %v553 = vmul.f32 %v380, %v476
      %v554 = vmul.f32 %v381, %v478
      %v555 = vmul.f32 %v382, %v480
      %v556 = vmul.f32 %v383, %v482
      %v557 = vmul.f32 %v384, %v484
      %v558 = vmul.f32 %v385, %v486
      %v559 = vmul.f32 %v386, %v488
      %v560 = vmul.f32 %v387, %v490
      %v561 = vmul.f32 %v388, %v492
      %v562 = vmul.f32 %v389, %v494
      %v563 = vmul.f32 %v390, %v496
      %v564 = vmul.f32 %v391, %v498
      %v565 = vmul.f32 %v392, %v500
      %v566 = vmul.f32 %v393, %v502
      %v567 = vmul.f32 %v551, %v551
      %v568 = vmul.f32 %v552, %v552
      %v569 = vmul.f32 %v553, %v553
      %v570 = vmul.f32 %v554, %v554
      %v571 = vmul.f32 %v555, %v555
      %v572 = vmul.f32 %v556, %v556
      %v573 = vmul.f32 %v557, %v557
      %v574 = vmul.f32 %v558, %v558
      %v575 = vmul.f32 %v559, %v559
      %v576 = vmul.f32 %v560, %v560
      %v577 = vmul.f32 %v561, %v561
      %v578 = vmul.f32 %v562, %v562
      %v579 = vmul.f32 %v563, %v563
      %v580 = vmul.f32 %v564, %v564
      %v581 = vmul.f32 %v565, %v565
      %v582 = vmul.f32 %v566, %v566
      %v583 = vmul.f32 %v567, 0.5
      %v584 = vmul.f32 %v568, 0.5
      %v585 = vmul.f32 %v569, 0.5
      %v586 = vmul.f32 %v570, 0.5
      %v587 = vmul.f32 %v571, 0.5
      %v588 = vmul.f32 %v572, 0.5
      %v589 = vmul.f32 %v573, 0.5
      %v590 = vmul.f32 %v574, 0.5
      %v591 = vmul.f32 %v575, 0.5
      %v592 = vmul.f32 %v576, 0.5
      %v593 = vmul.f32 %v577, 0.5
      %v594 = vmul.f32 %v578, 0.5
      %v595 = vmul.f32 %v579, 0.5
      %v596 = vmul.f32 %v580, 0.5
      %v597 = vmul.f32 %v581, 0.5
      %v598 = vmul.f32 %v582, 0.5
      %v599 = vsub.f32 %v535, %v583
      %v600 = vsub.f32 %v536, %v584
      %v601 = vsub.f32 %v537, %v585
      %v602 = vsub.f32 %v538, %v586
      %v603 = vsub.f32 %v539, %v587
      %v604 = vsub.f32 %v540, %v588
      %v605 = vsub.f32 %v541, %v589
      %v606 = vsub.f32 %v542, %v590
      %v607 = vsub.f32 %v543, %v591
      %v608 = vsub.f32 %v544, %v592
      %v609 = vsub.f32 %v545, %v593
      %v610 = vsub.f32 %v546, %v594
      %v611 = vsub.f32 %v547, %v595
      %v612 = vsub.f32 %v548, %v596
      %v613 = vsub.f32 %v549, %v597
      %v614 = vsub.f32 %v550, %v598
      %v615 = vmul.f32 %v394, %v394
      %v616 = vmul.f32 %v395, %v395
      %v617 = vmul.f32 %v396, %v396
      %v618 = vmul.f32 %v397, %v397
      %v619 = vmul.f32 %v398, %v398
      %v620 = vmul.f32 %v399, %v399
      %v621 = vmul.f32 %v400, %v400
      %v622 = vmul.f32 %v401, %v401
      %v623 = vmul.f32 %v402, %v402
      %v624 = vmul.f32 %v403, %v403
      %v625 = vmul.f32 %v404, %v404
      %v626 = vmul.f32 %v405, %v405
      %v627 = vmul.f32 %v406, %v406
      %v628 = vmul.f32 %v407, %v407
      %v629 = vmul.f32 %v408, %v408
      %v630 = vmul.f32 %v409, %v409
      %v631 = vmul.f32 %v615, -50.0
      %v632 = vmul.f32 %v616, -50.0
      %v633 = vmul.f32 %v617, -50.0
      %v634 = vmul.f32 %v618, -50.0
      %v635 = vmul.f32 %v619, -50.0
      %v636 = vmul.f32 %v620, -50.0
      %v637 = vmul.f32 %v621, -50.0
      %v638 = vmul.f32 %v622, -50.0
      %v639 = vmul.f32 %v623, -50.0
      %v640 = vmul.f32 %v624, -50.0
      %v641 = vmul.f32 %v625, -50.0
      %v642 = vmul.f32 %v626, -50.0
      %v643 = vmul.f32 %v627, -50.0
      %v644 = vmul.f32 %v628, -50.0
      %v645 = vmul.f32 %v629, -50.0
      %v646 = vmul.f32 %v630, -50.0
      %v647 = vld [vmem:[#allocation11] sm:$0x1]
      %v648 = vadd.f32 %v599, %v600
      %v649 = vadd.f32 %v648, %v601
      %v650 = vadd.f32 %v649, %v602
      %v651 = vadd.f32 %v650, %v603
      %v652 = vadd.f32 %v651, %v604
      %v653 = vadd.f32 %v652, %v605
      %v654 = vadd.f32 %v653, %v606
      %v655 = vadd.f32 %v654, %v607
      %v656 = vadd.f32 %v655, %v608
      %v657 = vadd.f32 %v656, %v609
      %v658 = vadd.f32 %v657, %v610
      %v659 = vadd.f32 %v658, %v611
      %v660 = vadd.f32 %v659, %v612
      %v661 = vadd.f32 %v660, %v613
      %v662 = vadd.f32 %v661, %v614
      %v663 = vrot.slane %v662, 4
      %v664 = vadd.f32 %v662, %v663
      %v665 = vrot.slane %v664, 2
      %v666 = vadd.f32 %v664, %v665
      %v667 = vrot.slane %v666, 1
      %v668 = vadd.f32 %v666, %v667
      %v669 = vadd.f32 %v647, %v668
      %670 = vst [vmem:[#allocation11] sm:$0x1] %v669
      %v671 = vld [vmem:[#allocation13] sm:$0x1]
      %v672 = vadd.f32 %v631, %v632
      %v673 = vadd.f32 %v672, %v633
      %v674 = vadd.f32 %v673, %v634
      %v675 = vadd.f32 %v674, %v635
      %v676 = vadd.f32 %v675, %v636
      %v677 = vadd.f32 %v676, %v637
      %v678 = vadd.f32 %v677, %v638
      %v679 = vadd.f32 %v678, %v639
      %v680 = vadd.f32 %v679, %v640
      %v681 = vadd.f32 %v680, %v641
      %v682 = vadd.f32 %v681, %v642
      %v683 = vadd.f32 %v682, %v643
      %v684 = vadd.f32 %v683, %v644
      %v685 = vadd.f32 %v684, %v645
      %v686 = vadd.f32 %v685, %v646
      %v687 = vrot.slane %v686, 4
      %v688 = vadd.f32 %v686, %v687
      %v689 = vrot.slane %v688, 2
      %v690 = vadd.f32 %v688, %v689
      %v691 = vrot.slane %v690, 1
      %v692 = vadd.f32 %v690, %v691
      %v693 = vadd.f32 %v671, %v692
      %694 = vst [vmem:[#allocation13] sm:$0x1] %v693
    $region53: #{tpu_custom_call.1} parent=1 // pred_fallthru
      _
    // Predicated region
    $region58: #{tpu_custom_call.1} parent=1 // pred_check
      %p695 = pneg %p85
    $region59: #{tpu_custom_call.1} parent=1 // pred_check_branch
      %697 = sbr.rel (%p695) target = $region61
    $region60: #{tpu_custom_call.1} parent=1 // pred_region
      %v698 = vld [vmem:[%s4] sm:$0x1]
      %v699 = vld [vmem:[%s5] sm:$0x1]
      %v700 = vld [vmem:[%s6] sm:$0x1]
      %v701 = vmax.f32 %v699, 0.0
      %v702 = vand.u32 2147483647, %v699
      %v703 = vsub.f32 0.0, %v702
      %v704 = vmul.f32 %v703, 1.442695
      %v705 = vpow.pop %v704
      %v706 = vadd.f32 %v705, 1.0
      %v707 = vlog2.pop %v706
      %v708 = vmul.f32 %v707, 0.6931472
      %v709 = vmul.f32 -0.5, %v705
      %v710 = vadd.f32 %v709, 1.0
      %v711 = vmul.f32 %v710, %v705
      %v712 = vand.u32 2147483647, %v705
      %vm713 = vcmp.lt.f32.partialorder %v712, 0.0004427343
      %v714 = vsel %vm713, %v711, %v708
      %v715 = vadd.f32 %v701, %v714
      %v716 = vmul.f32 %v715, %v700
      %v717 = vadd.f32 %v698, %v716
      %v718 = vld [vmem:[#allocation10] sm:$0xff]
      %v720 = vlaneseq
      %v721 = vshrl.u32 %v720, 7
      %v722 = vsub.s32 0, %v721
      %v723 = vrot.slane %v717, %v722
      %v725 = vadd.f32 %v718, %v723
      %726 = vst [vmem:[#allocation10] sm:$0xff] %v725
      // Predicated region
      $region62: #{tpu_custom_call.1} parent=60 // pred_check
        %p727 = pneg %p462
      $region63: #{tpu_custom_call.1} parent=60 // pred_check_branch
        %729 = sbr.rel (%p727) target = $region65
      $region64: #{tpu_custom_call.1} parent=60 // pred_region
        %v730 = vld [vmem:[#allocation11] sm:$0x1]
        %v731 = vlog2.pop %v699
        %v732 = vmul.f32 %v731, 0.6931472
        %v733 = vsub.f32 0.0, %v732
        %v734 = vrcp.pop %v699
        %v735 = vmul.f32 %v716, %v734
        %v736 = vmul.f32 %v735, %v735
        %v737 = vmul.f32 %v736, 0.5
        %v738 = vsub.f32 %v733, %v737
        %v739 = vadd.f32 %v730, %v738
        %740 = vst [vmem:[#allocation11] sm:$0x1] %v739
        %v741 = vld [vmem:[#allocation13] sm:$0x1]
        %v742 = vmul.f32 %v717, %v717
        %v743 = vmul.f32 %v742, -50.0
        %v744 = vadd.f32 %v741, %v743
        %745 = vst [vmem:[#allocation13] sm:$0x1] %v744
      $region65: #{tpu_custom_call.1} parent=60 // pred_fallthru
        _
    $region61: #{tpu_custom_call.1} parent=1 // pred_fallthru
      _
    // Predicated region
    $region66: #{tpu_custom_call.1} parent=1 // pred_check
      _
    $region67: #{tpu_custom_call.1} parent=1 // pred_check_branch
      %747 = sbr.rel (0) target = $region69
    $region68: #{tpu_custom_call.1} parent=1 // pred_region
      %s749 = ssub.s32 128, 128
      %750 = vsyncadd [#allocation4], %s749
      %s752 = sshll.u32 [#allocation10], 4
      %s753 = int_to_ptr.vmem [resolvable:$true] %s752
      %755 = dma.vmem_to_hbm [thread:$0]  %s753, 128, %s7, [#allocation4]
    $region69: #{tpu_custom_call.1} parent=1 // pred_fallthru
      _
    // Predicated region
    $region70: #{tpu_custom_call.1} parent=1 // pred_check
      _
    $region71: #{tpu_custom_call.1} parent=1 // pred_check_branch
      %757 = sbr.rel (0) target = $region73
    $region72: #{tpu_custom_call.1} parent=1 // pred_region
      %s759 = ssub.s32 16, 16
      %760 = vsyncadd [#allocation12], %s759
      %s762 = sshll.u32 [#allocation11], 4
      %s763 = int_to_ptr.vmem [resolvable:$true] %s762
      %765 = dma.vmem_to_hbm [thread:$0]  %s763, 16, %s8, [#allocation12]
    $region73: #{tpu_custom_call.1} parent=1 // pred_fallthru
      _
    // Predicated region
    $region74: #{tpu_custom_call.1} parent=1 // pred_check
      _
    $region75: #{tpu_custom_call.1} parent=1 // pred_check_branch
      %767 = sbr.rel (0) target = $region77
    $region76: #{tpu_custom_call.1} parent=1 // pred_region
      %s769 = ssub.s32 16, 16
      %770 = vsyncadd [#allocation12], %s769
      %s772 = sshll.u32 [#allocation13], 4
      %s773 = int_to_ptr.vmem [resolvable:$true] %s772
      %775 = dma.vmem_to_hbm [thread:$0]  %s773, 16, %s9, [#allocation12]
    $region77: #{tpu_custom_call.1} parent=1 // pred_fallthru
      _
    // Predicated region
    $region78: #{tpu_custom_call.1} parent=1 // pred_check
      _
    $region79: #{tpu_custom_call.1} parent=1 // pred_check_branch
      %777 = sbr.rel (0) target = $region81
    $region80: #{tpu_custom_call.1} parent=1 // pred_region
      %778 = dma.done [#allocation4], 128
    $region81: #{tpu_custom_call.1} parent=1 // pred_fallthru
      _
    // Predicated region
    $region82: #{tpu_custom_call.1} parent=1 // pred_check
      _
    $region83: #{tpu_custom_call.1} parent=1 // pred_check_branch
      %780 = sbr.rel (0) target = $region85
    $region84: #{tpu_custom_call.1} parent=1 // pred_region
      %781 = dma.done [#allocation12], 16
    $region85: #{tpu_custom_call.1} parent=1 // pred_fallthru
      _
    // Predicated region
    $region86: #{tpu_custom_call.1} parent=1 // pred_check
      _
    $region87: #{tpu_custom_call.1} parent=1 // pred_check_branch
      %783 = sbr.rel (0) target = $region89
    $region88: #{tpu_custom_call.1} parent=1 // pred_region
      %784 = dma.done [#allocation12], 16
    $region89: #{tpu_custom_call.1} parent=1 // pred_fallthru
      _
    %785 = vsyncpa [#allocation3], 1
    %786 = vsyncpa [#allocation6], 1
    %787 = vsyncpa [#allocation9], 1
    %788 = vsyncpa [#allocation4], 1
    %789 = vsyncpa [#allocation12], 1

</llo_original>
